<compile_context>
chip_gen: v7x
topology: tpu7x:2x2x1
jax: 0.10.0
libtpu: 0.0.40
codegen_flags: <defaults>
</compile_context>

<pallas_src>
import jax
import jax.numpy as jnp
from jax.experimental import pallas as pl
from jax.experimental.pallas import tpu as pltpu


def _span_pool_proj_kernel(mask_ref, spans_ref, w_ref, b_ref, out_ref, pooled_ref):
    # mask_ref:   (B*S,)        f32 SMEM  (pre-normalized weights, flat)
    # spans_ref:  (TB, L, S*Din)    VMEM
    # w_ref:      (Din, Dout)       VMEM (grid-invariant)
    # b_ref:      (1, Dout)         VMEM (grid-invariant)
    # out_ref:    (1, TB*L, Dout)   VMEM
    # pooled_ref: (TB*L, Din)   f32 VMEM scratch
    i = pl.program_id(0)
    TB, L, SD = spans_ref.shape
    Din = pooled_ref.shape[1]
    S = SD // Din

    # Masked-average pooling: S scalar*vreg multiply-adds per batch row (pure VPU).
    for tb in range(TB):
        row = i * TB + tb
        acc = spans_ref[tb, :, pl.ds(0, Din)].astype(jnp.float32) * mask_ref[row * S]
        for s in range(1, S):
            acc = acc + (
                spans_ref[tb, :, pl.ds(s * Din, Din)].astype(jnp.float32)
                * mask_ref[row * S + s]
            )
        pooled_ref[pl.ds(tb * L, L), :] = acc            # assemble (TB*L, Din) slab

    # One big MXU matmul per grid step: M = TB*L rows at once.
    proj = jnp.dot(pooled_ref[...], w_ref[...], preferred_element_type=jnp.float32)
    out_ref[0] = (proj + b_ref[...]).astype(out_ref.dtype)   # lane-dense full-slab store


def _span_pool_kernel(mask_ref, spans_ref, out_ref):
    # use_proj=False path: no matmul, no weights.
    # mask_ref:  (B*S,)      f32 SMEM (flat)
    # spans_ref: (TB, L, S*D)    VMEM
    # out_ref:   (1, TB*L, D)    VMEM
    i = pl.program_id(0)
    TB, L, SD = spans_ref.shape
    D = out_ref.shape[-1]
    S = SD // D
    for tb in range(TB):
        row = i * TB + tb
        acc = spans_ref[tb, :, pl.ds(0, D)].astype(jnp.float32) * mask_ref[row * S]
        for s in range(1, S):
            acc = acc + (
                spans_ref[tb, :, pl.ds(s * D, D)].astype(jnp.float32)
                * mask_ref[row * S + s]
            )
        out_ref[0, pl.ds(tb * L, L), :] = acc.astype(out_ref.dtype)


def _pick_batch_tile(B, bytes_per_row, budget=8 * 1024 * 1024):
    """Largest divisor of B fitting `budget` bytes; prefer >= 2 grid steps (megacore)."""
    divisors = [d for d in range(1, B + 1) if B % d == 0]
    fitting = [d for d in divisors if d * bytes_per_row <= budget] or [1]
    if B >= 2:
        smaller = [d for d in fitting if d < B]
        return smaller[-1] if smaller else fitting[-1]
    return fitting[-1]


def span_repr_forward(spans, attention_mask, w=None, b=None):
    """spans: (B, L, S, Din); attention_mask: (B, S); optional w: (Din, Dout), b: (1, Dout)."""
    B, L, S, Din = spans.shape
    use_proj = w is not None
    Dout = w.shape[1] if use_proj else Din

    # Fold 1/denom into the mask host-side; clamp avoids NaN for empty spans.
    m = attention_mask.astype(jnp.float32)
    denom = jnp.maximum(jnp.sum(m, axis=-1, keepdims=True), 1.0)
    mask_w = (m / denom).reshape(B * S)                      # flat (B*S,) -> SMEM

    # Free reshape (contiguous): per-token slices become aligned lane slices in-kernel.
    spans2 = spans.reshape(B, L, S * Din)

    bytes_per_row = L * S * Din * spans.dtype.itemsize
    tb = _pick_batch_tile(B, bytes_per_row)
    G = B // tb

    out_shape = jax.ShapeDtypeStruct((G, tb * L, Dout), spans.dtype)
    out_spec = pl.BlockSpec((1, tb * L, Dout), lambda i: (i, 0, 0))
    mask_spec = pl.BlockSpec(memory_space=pltpu.MemorySpace.SMEM)   # whole flat mask in SMEM
    spans_spec = pl.BlockSpec((tb, L, S * Din), lambda i: (i, 0, 0))
    cparams = pltpu.CompilerParams(dimension_semantics=("parallel",))

    if use_proj:
        out = pl.pallas_call(
            _span_pool_proj_kernel,
            out_shape=out_shape,
            grid_spec=pltpu.PrefetchScalarGridSpec(
                num_scalar_prefetch=0,
                grid=(G,),
                in_specs=[
                    mask_spec,
                    spans_spec,
                    pl.BlockSpec((Din, Dout), lambda i: (0, 0)),    # grid-invariant weights
                    pl.BlockSpec((1, Dout), lambda i: (0, 0)),      # grid-invariant bias
                ],
                out_specs=out_spec,
                scratch_shapes=[pltpu.VMEM((tb * L, Din), jnp.float32)],
            ),
            compiler_params=cparams,
        )(mask_w, spans2, w, b)
    else:
        out = pl.pallas_call(
            _span_pool_kernel,
            out_shape=out_shape,
            grid_spec=pltpu.PrefetchScalarGridSpec(
                num_scalar_prefetch=0,
                grid=(G,),
                in_specs=[mask_spec, spans_spec],
                out_specs=out_spec,
            ),
            compiler_params=cparams,
        )(mask_w, spans2)

    # (G, tb*L, Dout) -> (B, L, Dout): free, contiguous reshape.
    return out.reshape(B, L, Dout)


class AvgSpanReprPallas:
    """Concrete SpanRepr: masked mean over span tokens, optional linear projection."""

    def __init__(self, input_dim, use_proj=False, proj_dim=256, key=None):
        self.input_dim = input_dim
        self.proj_dim = proj_dim
        self.use_proj = use_proj
        if use_proj:
            kw, kb = jax.random.split(key)
            bound = 1.0 / (input_dim ** 0.5)
            self.w = jax.random.uniform(kw, (input_dim, proj_dim), jnp.float32, -bound, bound)
            self.b = jax.random.uniform(kb, (1, proj_dim), jnp.float32, -bound, bound)
        else:
            self.w = None   # no identity matmul: projection skipped entirely at trace time
            self.b = None

    def get_input_dim(self):
        return self.input_dim

    def __call__(self, spans, attention_mask):
        if self.use_proj:
            return span_repr_forward(spans, attention_mask, self.w, self.b)
        return span_repr_forward(spans, attention_mask)


if __name__ == "__main__":
    key = jax.random.PRNGKey(0)
    k_spans, k_proj = jax.random.split(key)

    # Small shapes consistent with the docstring [batch, layers, span_max_len, dim];
    # feature dims chosen as multiples of 128 for lane-dense stores.
    B, L, S, D = 4, 13, 4, 128
    P = 256
    spans = jax.random.normal(k_spans, (B, L, S, D), dtype=jnp.float32)
    attention_mask = jnp.array([[1, 1, 1, 0],
                                [1, 1, 0, 0],
                                [1, 1, 1, 1],
                                [0, 0, 0, 0]], dtype=jnp.float32)   # includes an empty span

    # Pure-JAX reference (pool first, then project; clamp matches the kernel wrapper).
    denom = jnp.maximum(attention_mask.sum(axis=1), 1.0)
    mask_w = attention_mask / denom[:, None]
    pooled_ref = (spans * mask_w[:, None, :, None]).sum(axis=2)     # (B, L, D)

    # use_proj=True path (fused MXU projection).
    module = AvgSpanReprPallas(input_dim=D, use_proj=True, proj_dim=P, key=k_proj)
    out = jax.block_until_ready(module(spans, attention_mask))
    assert out.shape == (B, L, P)
    ref = pooled_ref @ module.w + module.b
    assert jnp.allclose(out, ref, atol=5e-3, rtol=5e-3), float(jnp.max(jnp.abs(out - ref)))

    # use_proj=False path (no matmul in the kernel).
    module_id = AvgSpanReprPallas(input_dim=D, use_proj=False)
    out_id = jax.block_until_ready(module_id(spans, attention_mask))
    assert out_id.shape == (B, L, D)
    assert jnp.allclose(out_id, pooled_ref, atol=1e-5, rtol=1e-5)

    print("KERNEL_OK")
</pallas_src>

<mosaic_0001>
module attributes {stable_mosaic.version = 11 : i64} {
  func.func @_span_pool_proj_kernel(%arg0: i32, %arg1: memref<16xf32, #tpu.memory_space<smem>>, %arg2: memref<2x13x512xf32, #tpu.memory_space<vmem>>, %arg3: memref<128x256xf32, #tpu.memory_space<vmem>>, %arg4: memref<1x256xf32, #tpu.memory_space<vmem>>, %arg5: memref<1x26x256xf32, #tpu.memory_space<vmem>>, %arg6: memref<26x128xf32, #tpu.memory_space<vmem>>) attributes {dimension_semantics = [#tpu.dimension_semantics<parallel>], iteration_bounds = array<i64: 2>, scalar_prefetch = 0 : i64, scratch_operands = 1 : i64, tpu.core_type = #tpu.core_type<tc>, window_params = [{transform_indices = @transform_0, window_bounds = array<i64: 16>}, {transform_indices = @transform_1, window_bounds = array<i64: 2, 13, 512>}, {pipeline_mode = #tpu.pipeline_mode<synchronous>, transform_indices = @transform_2, window_bounds = array<i64: 128, 256>}, {pipeline_mode = #tpu.pipeline_mode<synchronous>, transform_indices = @transform_3, window_bounds = array<i64: 1, 256>}, {transform_indices = @transform_4, window_bounds = array<i64: 1, 26, 256>}]} {
    %c2_i32 = arith.constant 2 : i32
    %0 = arith.muli %arg0, %c2_i32 : i32
    %c0_i32 = arith.constant 0 : i32
    %1 = arith.addi %0, %c0_i32 : i32
    %c0 = arith.constant 0 : index
    %c0_0 = arith.constant 0 : index
    %c0_1 = arith.constant 0 : index
    %2 = vector.load %arg2[%c0, %c0_0, %c0_1] : memref<2x13x512xf32, #tpu.memory_space<vmem>>, vector<1x13x128xf32>
    %3 = vector.shape_cast %2 : vector<1x13x128xf32> to vector<13x128xf32>
    %c4_i32 = arith.constant 4 : i32
    %4 = arith.muli %1, %c4_i32 : i32
    %5 = arith.index_cast %4 : i32 to index
    %6 = memref.load %arg1[%5] : memref<16xf32, #tpu.memory_space<smem>>
    %7 = vector.broadcast %6 : f32 to vector<13x128xf32>
    %8 = arith.mulf %3, %7 : vector<13x128xf32>
    %c0_2 = arith.constant 0 : index
    %c0_3 = arith.constant 0 : index
    %c128 = arith.constant 128 : index
    %9 = vector.load %arg2[%c0_2, %c0_3, %c128] : memref<2x13x512xf32, #tpu.memory_space<vmem>>, vector<1x13x128xf32>
    %10 = vector.shape_cast %9 : vector<1x13x128xf32> to vector<13x128xf32>
    %c4_i32_4 = arith.constant 4 : i32
    %11 = arith.muli %1, %c4_i32_4 : i32
    %c1_i32 = arith.constant 1 : i32
    %12 = arith.addi %11, %c1_i32 : i32
    %13 = arith.index_cast %12 : i32 to index
    %14 = memref.load %arg1[%13] : memref<16xf32, #tpu.memory_space<smem>>
    %15 = vector.broadcast %14 : f32 to vector<13x128xf32>
    %16 = arith.mulf %10, %15 : vector<13x128xf32>
    %17 = arith.addf %8, %16 : vector<13x128xf32>
    %c0_5 = arith.constant 0 : index
    %c0_6 = arith.constant 0 : index
    %c256 = arith.constant 256 : index
    %18 = vector.load %arg2[%c0_5, %c0_6, %c256] : memref<2x13x512xf32, #tpu.memory_space<vmem>>, vector<1x13x128xf32>
    %19 = vector.shape_cast %18 : vector<1x13x128xf32> to vector<13x128xf32>
    %c4_i32_7 = arith.constant 4 : i32
    %20 = arith.muli %1, %c4_i32_7 : i32
    %c2_i32_8 = arith.constant 2 : i32
    %21 = arith.addi %20, %c2_i32_8 : i32
    %22 = arith.index_cast %21 : i32 to index
    %23 = memref.load %arg1[%22] : memref<16xf32, #tpu.memory_space<smem>>
    %24 = vector.broadcast %23 : f32 to vector<13x128xf32>
    %25 = arith.mulf %19, %24 : vector<13x128xf32>
    %26 = arith.addf %17, %25 : vector<13x128xf32>
    %c0_9 = arith.constant 0 : index
    %c0_10 = arith.constant 0 : index
    %c384 = arith.constant 384 : index
    %27 = vector.load %arg2[%c0_9, %c0_10, %c384] : memref<2x13x512xf32, #tpu.memory_space<vmem>>, vector<1x13x128xf32>
    %28 = vector.shape_cast %27 : vector<1x13x128xf32> to vector<13x128xf32>
    %c4_i32_11 = arith.constant 4 : i32
    %29 = arith.muli %1, %c4_i32_11 : i32
    %c3_i32 = arith.constant 3 : i32
    %30 = arith.addi %29, %c3_i32 : i32
    %31 = arith.index_cast %30 : i32 to index
    %32 = memref.load %arg1[%31] : memref<16xf32, #tpu.memory_space<smem>>
    %33 = vector.broadcast %32 : f32 to vector<13x128xf32>
    %34 = arith.mulf %28, %33 : vector<13x128xf32>
    %35 = arith.addf %26, %34 : vector<13x128xf32>
    %c0_12 = arith.constant 0 : index
    %c0_13 = arith.constant 0 : index
    %36 = vector.load %arg6[%c0_12, %c0_13] : memref<26x128xf32, #tpu.memory_space<vmem>>, vector<13x128xf32>
    tpu.vector_store %arg6[%c0_12, %c0_13], %35 {strides = array<i32>} : memref<26x128xf32, #tpu.memory_space<vmem>>, vector<13x128xf32>,
    %c2_i32_14 = arith.constant 2 : i32
    %37 = arith.muli %arg0, %c2_i32_14 : i32
    %c1_i32_15 = arith.constant 1 : i32
    %38 = arith.addi %37, %c1_i32_15 : i32
    %c1 = arith.constant 1 : index
    %c0_16 = arith.constant 0 : index
    %c0_17 = arith.constant 0 : index
    %39 = vector.load %arg2[%c1, %c0_16, %c0_17] : memref<2x13x512xf32, #tpu.memory_space<vmem>>, vector<1x13x128xf32>
    %40 = vector.shape_cast %39 : vector<1x13x128xf32> to vector<13x128xf32>
    %c4_i32_18 = arith.constant 4 : i32
    %41 = arith.muli %38, %c4_i32_18 : i32
    %42 = arith.index_cast %41 : i32 to index
    %43 = memref.load %arg1[%42] : memref<16xf32, #tpu.memory_space<smem>>
    %44 = vector.broadcast %43 : f32 to vector<13x128xf32>
    %45 = arith.mulf %40, %44 : vector<13x128xf32>
    %c1_19 = arith.constant 1 : index
    %c0_20 = arith.constant 0 : index
    %c128_21 = arith.constant 128 : index
    %46 = vector.load %arg2[%c1_19, %c0_20, %c128_21] : memref<2x13x512xf32, #tpu.memory_space<vmem>>, vector<1x13x128xf32>
    %47 = vector.shape_cast %46 : vector<1x13x128xf32> to vector<13x128xf32>
    %c4_i32_22 = arith.constant 4 : i32
    %48 = arith.muli %38, %c4_i32_22 : i32
    %c1_i32_23 = arith.constant 1 : i32
    %49 = arith.addi %48, %c1_i32_23 : i32
    %50 = arith.index_cast %49 : i32 to index
    %51 = memref.load %arg1[%50] : memref<16xf32, #tpu.memory_space<smem>>
    %52 = vector.broadcast %51 : f32 to vector<13x128xf32>
    %53 = arith.mulf %47, %52 : vector<13x128xf32>
    %54 = arith.addf %45, %53 : vector<13x128xf32>
    %c1_24 = arith.constant 1 : index
    %c0_25 = arith.constant 0 : index
    %c256_26 = arith.constant 256 : index
    %55 = vector.load %arg2[%c1_24, %c0_25, %c256_26] : memref<2x13x512xf32, #tpu.memory_space<vmem>>, vector<1x13x128xf32>
    %56 = vector.shape_cast %55 : vector<1x13x128xf32> to vector<13x128xf32>
    %c4_i32_27 = arith.constant 4 : i32
    %57 = arith.muli %38, %c4_i32_27 : i32
    %c2_i32_28 = arith.constant 2 : i32
    %58 = arith.addi %57, %c2_i32_28 : i32
    %59 = arith.index_cast %58 : i32 to index
    %60 = memref.load %arg1[%59] : memref<16xf32, #tpu.memory_space<smem>>
    %61 = vector.broadcast %60 : f32 to vector<13x128xf32>
    %62 = arith.mulf %56, %61 : vector<13x128xf32>
    %63 = arith.addf %54, %62 : vector<13x128xf32>
    %c1_29 = arith.constant 1 : index
    %c0_30 = arith.constant 0 : index
    %c384_31 = arith.constant 384 : index
    %64 = vector.load %arg2[%c1_29, %c0_30, %c384_31] : memref<2x13x512xf32, #tpu.memory_space<vmem>>, vector<1x13x128xf32>
    %65 = vector.shape_cast %64 : vector<1x13x128xf32> to vector<13x128xf32>
    %c4_i32_32 = arith.constant 4 : i32
    %66 = arith.muli %38, %c4_i32_32 : i32
    %c3_i32_33 = arith.constant 3 : i32
    %67 = arith.addi %66, %c3_i32_33 : i32
    %68 = arith.index_cast %67 : i32 to index
    %69 = memref.load %arg1[%68] : memref<16xf32, #tpu.memory_space<smem>>
    %70 = vector.broadcast %69 : f32 to vector<13x128xf32>
    %71 = arith.mulf %65, %70 : vector<13x128xf32>
    %72 = arith.addf %63, %71 : vector<13x128xf32>
    %c13 = arith.constant 13 : index
    %c0_34 = arith.constant 0 : index
    %73 = vector.load %arg6[%c13, %c0_34] : memref<26x128xf32, #tpu.memory_space<vmem>>, vector<13x128xf32>
    tpu.vector_store %arg6[%c13, %c0_34], %72 {strides = array<i32>} : memref<26x128xf32, #tpu.memory_space<vmem>>, vector<13x128xf32>,
    %c0_35 = arith.constant 0 : index
    %c0_36 = arith.constant 0 : index
    %74 = vector.load %arg6[%c0_35, %c0_36] : memref<26x128xf32, #tpu.memory_space<vmem>>, vector<26x128xf32>
    %c0_37 = arith.constant 0 : index
    %c0_38 = arith.constant 0 : index
    %75 = vector.load %arg3[%c0_37, %c0_38] : memref<128x256xf32, #tpu.memory_space<vmem>>, vector<128x256xf32>
    %cst = arith.constant dense<0.000000e+00> : vector<26x256xf32>
    %76 = tpu.matmul %74, %75, %cst {dimension_numbers = #tpu.dot_dimension_numbers<[1], [0], [0], [1], [0, 0, 1, 1], [], []>} : vector<26x128xf32>, vector<128x256xf32>, vector<26x256xf32> -> vector<26x256xf32>
    %c0_39 = arith.constant 0 : index
    %c0_40 = arith.constant 0 : index
    %77 = vector.load %arg4[%c0_39, %c0_40] : memref<1x256xf32, #tpu.memory_space<vmem>>, vector<1x256xf32>
    %78 = vector.broadcast %77 : vector<1x256xf32> to vector<26x256xf32>
    %79 = arith.addf %76, %78 : vector<26x256xf32>
    %c0_41 = arith.constant 0 : index
    %c0_42 = arith.constant 0 : index
    %c0_43 = arith.constant 0 : index
    %80 = vector.load %arg5[%c0_41, %c0_42, %c0_43] : memref<1x26x256xf32, #tpu.memory_space<vmem>>, vector<1x26x256xf32>
    %81 = vector.shape_cast %80 : vector<1x26x256xf32> to vector<26x256xf32>
    %82 = vector.shape_cast %79 : vector<26x256xf32> to vector<1x26x256xf32>
    tpu.vector_store %arg5[%c0_41, %c0_42, %c0_43], %82 {strides = array<i32>} : memref<1x26x256xf32, #tpu.memory_space<vmem>>, vector<1x26x256xf32>,
    return
  }
  func.func @transform_0(%arg0: i32) -> i32 {
    %c0_i32 = arith.constant 0 : i32
    %c0_i32_0 = arith.constant 0 : i32
    return %c0_i32 : i32
  }
  func.func @transform_1(%arg0: i32) -> (i32, i32, i32) {
    %c0_i32 = arith.constant 0 : i32
    %c0_i32_0 = arith.constant 0 : i32
    %c0_i32_1 = arith.constant 0 : i32
    return %arg0, %c0_i32, %c0_i32_0 : i32, i32, i32
  }
  func.func @transform_2(%arg0: i32) -> (i32, i32) {
    %c0_i32 = arith.constant 0 : i32
    %c0_i32_0 = arith.constant 0 : i32
    %c0_i32_1 = arith.constant 0 : i32
    return %c0_i32, %c0_i32_0 : i32, i32
  }
  func.func @transform_3(%arg0: i32) -> (i32, i32) {
    %c0_i32 = arith.constant 0 : i32
    %c0_i32_0 = arith.constant 0 : i32
    %c0_i32_1 = arith.constant 0 : i32
    return %c0_i32, %c0_i32_0 : i32, i32
  }
  func.func @transform_4(%arg0: i32) -> (i32, i32, i32) {
    %c0_i32 = arith.constant 0 : i32
    %c0_i32_0 = arith.constant 0 : i32
    %c0_i32_1 = arith.constant 0 : i32
    return %arg0, %c0_i32, %c0_i32_0 : i32, i32, i32
  }
}

</mosaic_0001>

<llo_original>
// kernel: tpu_custom_call.1
$region0: #{tpu_custom_call.1}
  #allocation0 [shape = 'u32[]', space=smem, size = 0x4, offset = 0x4, fixed_abs, tag = 'smem constant byte address 0x4 - core index']
  #allocation1 [shape = 'u32[144,128]{1,0:T(1,128)}', space=vmem, size = 0x12000, scoped, tag = 'internal scratch']
  #allocation2 [shape = 'f32[26,128]{1,0:T(8,128)}', space=vmem, size = 0x4000, scoped, tag = 'scratch operand']
  %s0 = inlined_call_operand.vmem [shape: f32[16], index: 0, kind: input, shape index: {}]
  %s1 = inlined_call_operand.vmem [shape: f32[4,13,512], index: 1, kind: input, shape index: {}]
  %s2 = inlined_call_operand.vmem [shape: f32[128,256], index: 2, kind: input, shape index: {}]
  %s3 = inlined_call_operand.vmem [shape: f32[1,256], index: 3, kind: input, shape index: {}]
  %s4 = inlined_call_operand.vmem [shape: f32[2,26,256], index: 4, kind: output, shape index: {}]
  %s5 = sld [smem:[#allocation0]]
  $region53: #{tpu_custom_call.1} parent=0
    _
  %s7 = ssub.s32 1, %s5
  %s8 = scalar_select 0, %s7, %s5
  $region1: #{tpu_custom_call.1} parent=0
    #allocation3 [shape = 'u8[512]{0}', space=smem, size = 0x200, scoped, tag = 'input window, operand 0, single buffered']
    #allocation4 [shape = 's32[2]{0}', space=sflag, size = 0x8, scoped, tag = 'scoped memory for tpu_custom_call.1']
    %9 = vsyncpa [#allocation4], 0
    loop: start=0, step=1, limit=4
    $region2: #{tpu_custom_call.1} parent=1 // loop_pre_header
      _
    $region3: #{tpu_custom_call.1} parent=1 // loop_header
      %s11 = sphi 0, %s15
      %p12 = scmp.ge.s32.totalorder %s11, 4
      %s19 = sphi 0, %s19
      %s21 = sphi 0, %s19
      %s22 = sphi 0, %s21
      %s36 = sphi 0, %s22
      %s42 = sphi 0, %s44
      %s45 = sphi 0, %s42
      %s46 = sphi 0, %s45
      %s62 = sphi 0, %s46
      %s66 = sphi 0, %s66
      %s68 = sphi 0, %s66
      %s69 = sphi 0, %s68
      %s83 = sphi 0, %s69
      %s87 = sphi 0, %s87
      %s89 = sphi 0, %s87
      %s90 = sphi 0, %s89
      %s104 = sphi 0, %s90
      %s110 = sphi 0, %s112
      %s113 = sphi 0, %s110
      %s114 = sphi 0, %s113
      %s130 = sphi 0, %s114
    $region4: #{tpu_custom_call.1} parent=1 // loop_header_branch
      %14 = sbr.rel (%p12) target = $region8
    $region5: #{tpu_custom_call.1} parent=1 // loop_body
      %s16 = ssub.s32 %s11, 1
      %s17 = ssub.s32 %s11, 2
      %s18 = sadd.s32 %s11, 1
      %s20 = sadd.s32 %s19, 1
      %p23 = scmp.eq.s32.totalorder %s11, 1
      %p24 = scmp.ne.s32.totalorder %s19, %s21
      %p25 = scmp.eq.s32.totalorder %s11, 0
      %p26 = por %p24, %p25
      %p27 = scmp.ne.s32.totalorder %s19, %s21
      %p28 = scmp.eq.s32.totalorder %s16, 1
      %p29 = por %p27, %p28
      %p30 = scmp.ne.s32.totalorder %s21, %s22
      %p31 = scmp.eq.s32.totalorder %s16, 0
      %p32 = por %p30, %p31
      %p33 = scmp.ne.s32.totalorder %s21, %s22
      %p34 = scmp.eq.s32.totalorder %s17, 1
      %p35 = por %p33, %p34
      %p37 = scmp.ne.s32.totalorder %s22, %s36
      %p38 = scmp.eq.s32.totalorder %s17, 0
      %p39 = por %p37, %p38
      %s40 = ssub.s32 %s11, %s18
      %p41 = scmp.eq.s32.totalorder %s40, 0
      %s43 = sadd.s32 %s42, 1
      %s44 = scalar_select %p41, %s42, %s43
      %p47 = pneg %p41
      %p48 = scmp.eq.s32.totalorder %s11, 1
      %p49 = por %p47, %p48
      %p50 = scmp.ne.s32.totalorder %s42, %s45
      %p51 = scmp.eq.s32.totalorder %s11, 0
      %p52 = por %p50, %p51
      %p53 = scmp.ne.s32.totalorder %s42, %s45
      %p54 = scmp.eq.s32.totalorder %s16, 1
      %p55 = por %p53, %p54
      %p56 = scmp.ne.s32.totalorder %s45, %s46
      %p57 = scmp.eq.s32.totalorder %s16, 0
      %p58 = por %p56, %p57
      %p59 = scmp.ne.s32.totalorder %s45, %s46
      %p60 = scmp.eq.s32.totalorder %s17, 1
      %p61 = por %p59, %p60
      %p63 = scmp.ne.s32.totalorder %s46, %s62
      %p64 = scmp.eq.s32.totalorder %s17, 0
      %p65 = por %p63, %p64
      %s67 = sadd.s32 %s66, 1
      %p70 = scmp.eq.s32.totalorder %s11, 1
      %p71 = scmp.ne.s32.totalorder %s66, %s68
      %p72 = scmp.eq.s32.totalorder %s11, 0
      %p73 = por %p71, %p72
      %p74 = scmp.ne.s32.totalorder %s66, %s68
      %p75 = scmp.eq.s32.totalorder %s16, 1
      %p76 = por %p74, %p75
      %p77 = scmp.ne.s32.totalorder %s68, %s69
      %p78 = scmp.eq.s32.totalorder %s16, 0
      %p79 = por %p77, %p78
      %p80 = scmp.ne.s32.totalorder %s68, %s69
      %p81 = scmp.eq.s32.totalorder %s17, 1
      %p82 = por %p80, %p81
      %p84 = scmp.ne.s32.totalorder %s69, %s83
      %p85 = scmp.eq.s32.totalorder %s17, 0
      %p86 = por %p84, %p85
      %s88 = sadd.s32 %s87, 1
      %p91 = scmp.eq.s32.totalorder %s11, 1
      %p92 = scmp.ne.s32.totalorder %s87, %s89
      %p93 = scmp.eq.s32.totalorder %s11, 0
      %p94 = por %p92, %p93
      %p95 = scmp.ne.s32.totalorder %s87, %s89
      %p96 = scmp.eq.s32.totalorder %s16, 1
      %p97 = por %p95, %p96
      %p98 = scmp.ne.s32.totalorder %s89, %s90
      %p99 = scmp.eq.s32.totalorder %s16, 0
      %p100 = por %p98, %p99
      %p101 = scmp.ne.s32.totalorder %s89, %s90
      %p102 = scmp.eq.s32.totalorder %s17, 1
      %p103 = por %p101, %p102
      %p105 = scmp.ne.s32.totalorder %s90, %s104
      %p106 = scmp.eq.s32.totalorder %s17, 0
      %p107 = por %p105, %p106
      %s108 = ssub.s32 %s11, %s18
      %p109 = scmp.eq.s32.totalorder %s108, 0
      %s111 = sadd.s32 %s110, 1
      %s112 = scalar_select %p109, %s110, %s111
      %p115 = pneg %p109
      %p116 = scmp.eq.s32.totalorder %s11, 1
      %p117 = por %p115, %p116
      %p118 = scmp.ne.s32.totalorder %s110, %s113
      %p119 = scmp.eq.s32.totalorder %s11, 0
      %p120 = por %p118, %p119
      %p121 = scmp.ne.s32.totalorder %s110, %s113
      %p122 = scmp.eq.s32.totalorder %s16, 1
      %p123 = por %p121, %p122
      %p124 = scmp.ne.s32.totalorder %s113, %s114
      %p125 = scmp.eq.s32.totalorder %s16, 0
      %p126 = por %p124, %p125
      %p127 = scmp.ne.s32.totalorder %s113, %s114
      %p128 = scmp.eq.s32.totalorder %s17, 1
      %p129 = por %p127, %p128
      %p131 = scmp.ne.s32.totalorder %s114, %s130
      %p132 = scmp.eq.s32.totalorder %s17, 0
      %p133 = por %p131, %p132
      %p134 = scmp.le.s32.totalorder 1, %s11
      %p135 = scmp.lt.s32.totalorder %s11, 3
      %p136 = pnand %p134, %p135
      %p137 = pneg %p136
      // Predicated region
      $region9: #{tpu_custom_call.1} parent=5 // pred_check
        _
      $region10: #{tpu_custom_call.1} parent=5 // pred_check_branch
        %139 = sbr.rel (%p136) target = $region12
      $region11: #{tpu_custom_call.1} parent=5 // pred_region
        %s140 = ssub.s32 %s11, 1
        // Predicated region
        $region13: #{tpu_custom_call.1} parent=11 // pred_check
          %p141 = pneg %p32
        $region14: #{tpu_custom_call.1} parent=11 // pred_check_branch
          %143 = sbr.rel (%p141) target = $region16
        $region15: #{tpu_custom_call.1} parent=11 // pred_region
          %s145 = ssub.s32 16, 16
          %146 = vsyncadd [#allocation4], %s145
          %s148 = sshll.u32 %s0, 4
          %s149 = int_to_ptr.vmem [resolvable:$true] %s148
          %151 = dma.vmem_to_smem %s149, 16, [#allocation3], [#allocation4]
        $region16: #{tpu_custom_call.1} parent=11 // pred_fallthru
          _
        // Predicated region
        $region17: #{tpu_custom_call.1} parent=11 // pred_check
          %p152 = pneg %p79
        $region18: #{tpu_custom_call.1} parent=11 // pred_check_branch
          %154 = sbr.rel (%p152) target = $region20
        $region19: #{tpu_custom_call.1} parent=11 // pred_region
          _
        $region20: #{tpu_custom_call.1} parent=11 // pred_fallthru
          _
        // Predicated region
        $region21: #{tpu_custom_call.1} parent=11 // pred_check
          %p155 = pneg %p100
        $region22: #{tpu_custom_call.1} parent=11 // pred_check_branch
          %157 = sbr.rel (%p155) target = $region24
        $region23: #{tpu_custom_call.1} parent=11 // pred_region
          _
        $region24: #{tpu_custom_call.1} parent=11 // pred_fallthru
          _
      $region12: #{tpu_custom_call.1} parent=5 // pred_fallthru
        _
      %p158 = scmp.lt.s32.totalorder %s11, 2
      // Predicated region
      $region25: #{tpu_custom_call.1} parent=5 // pred_check
        %p159 = pneg %p158
      $region26: #{tpu_custom_call.1} parent=5 // pred_check_branch
        %161 = sbr.rel (%p159) target = $region28
      $region27: #{tpu_custom_call.1} parent=5 // pred_region
        // Predicated region
        $region29: #{tpu_custom_call.1} parent=27 // pred_check
          %p162 = pneg %p52
        $region30: #{tpu_custom_call.1} parent=27 // pred_check_branch
          %164 = sbr.rel (%p162) target = $region32
        $region31: #{tpu_custom_call.1} parent=27 // pred_region
          %s165 = smul.u32 2, %s11
          %p166 = scmp.lt.s32.totalorder %s165, 3
          %s167 = scalar_select %p166, %s165, 3
          %s168 = smul.addr %s167, 8
          %s169 = smul.addr %s168, 8
          %s170 = scalar_lea.vmem %s1, %s169
          %s171 = smul.u32 2, %s11
        $region32: #{tpu_custom_call.1} parent=27 // pred_fallthru
          _
      $region28: #{tpu_custom_call.1} parent=5 // pred_fallthru
        _
      %p172 = scmp.le.s32.totalorder 1, %s11
      %p173 = scmp.lt.s32.totalorder %s11, 3
      %p174 = pnand %p172, %p173
      %p175 = pneg %p174
      // Predicated region
      $region33: #{tpu_custom_call.1} parent=5 // pred_check
        _
      $region34: #{tpu_custom_call.1} parent=5 // pred_check_branch
        %177 = sbr.rel (%p174) target = $region36
      $region35: #{tpu_custom_call.1} parent=5 // pred_region
        %s178 = ssub.s32 %s11, 1
        // Predicated region
        $region37: #{tpu_custom_call.1} parent=35 // pred_check
          %p179 = pneg %p32
        $region38: #{tpu_custom_call.1} parent=35 // pred_check_branch
          %181 = sbr.rel (%p179) target = $region40
        $region39: #{tpu_custom_call.1} parent=35 // pred_region
          %182 = dma.done [#allocation4], 16
        $region40: #{tpu_custom_call.1} parent=35 // pred_fallthru
          _
        %183 = sfence
        %p184 = pneg %p32
        %p185 = pneg %p29
        %s186 = smul.u32 2, %s16
        %p187 = scmp.lt.s32.totalorder %s186, 3
        %s188 = scalar_select %p187, %s186, 3
        %s189 = smul.addr %s188, 8
        %s190 = smul.addr %s189, 8
        %s191 = scalar_lea.vmem %s1, %s190
        %p192 = pneg %p58
        %p193 = pneg %p55
        %p194 = pneg %p79
        %p195 = pneg %p76
        %p196 = pneg %p100
        %p197 = pneg %p97
        %p198 = pneg %p126
        %p199 = pneg %p123
        %p200 = scmp.lt.s32.totalorder %s16, 1
        %s201 = scalar_select %p200, %s16, 1
        %s202 = smul.addr %s201, 8
        %s203 = smul.addr %s202, 8
        %s204 = scalar_lea.vmem %s4, %s203
        %s205 = smul.u32 2, %s16
        %p206 = scmp.lt.s32.totalorder %s205, 3
        %s207 = scalar_select %p206, %s205, 3
        %s208 = smul.addr %s207, 8
        %s209 = smul.addr %s208, 8
        %s210 = scalar_lea.vmem %s1, %s209
        %s211 = smul.u32 2, %s16
        %p212 = scmp.lt.s32.totalorder %s16, 1
        %s213 = scalar_select %p212, %s16, 1
        %s214 = smul.addr %s213, 8
        %s215 = smul.addr %s214, 8
        %s216 = scalar_lea.vmem %s4, %s215
        %v217 = vld [vmem:[%s210] sm:$0xff]
        %v218 = vld [vmem:[%s210 + $0x20] sm:$0x1f]
        %s219 = smul.u32 %s16, 8
        %s220 = sld [smem:[#allocation3 + %s219]]
        %v221 = vstv %s220
        %v222 = vmul.f32 %v217, %v221
        %v223 = vmul.f32 %v218, %v221
        %v224 = vld [vmem:[%s210 + $0x8] sm:$0xff]
        %v225 = vld [vmem:[%s210 + $0x28] sm:$0x1f]
        %s226 = sadd.s32 %s219, 1
        %s227 = sld [smem:[#allocation3 + %s226]]
        %v228 = vstv %s227
        %v229 = vmul.f32 %v224, %v228
        %v230 = vmul.f32 %v225, %v228
        %v231 = vadd.f32 %v222, %v229
        %v232 = vadd.f32 %v223, %v230
        %v233 = vld [vmem:[%s210 + $0x10] sm:$0xff]
        %v234 = vld [vmem:[%s210 + $0x30] sm:$0x1f]
        %s235 = sadd.s32 %s219, 2
        %s236 = sld [smem:[#allocation3 + %s235]]
        %v237 = vstv %s236
        %v238 = vmul.f32 %v233, %v237
        %v239 = vmul.f32 %v234, %v237
        %v240 = vadd.f32 %v231, %v238
        %v241 = vadd.f32 %v232, %v239
        %v242 = vld [vmem:[%s210 + $0x18] sm:$0xff]
        %v243 = vld [vmem:[%s210 + $0x38] sm:$0x1f]
        %s244 = sadd.s32 %s219, 3
        %s245 = sld [smem:[#allocation3 + %s244]]
        %v246 = vstv %s245
        %v247 = vmul.f32 %v242, %v246
        %v248 = vmul.f32 %v243, %v246
        %v249 = vadd.f32 %v240, %v247
        %v250 = vadd.f32 %v241, %v248
        %251 = vst [vmem:[#allocation2] sm:$0xff] %v249
        %252 = vst [vmem:[#allocation2 + $0x8] sm:$0x1f] %v250
        %s253 = smul.u32 %s16, 2
        %s254 = sadd.s32 %s253, 1
        %s255 = scalar_lea.vmem %s210, 64
        %v256 = vld [vmem:[%s255] sm:$0xff]
        %v257 = vld [vmem:[%s255 + $0x20] sm:$0x1f]
        %s258 = smul.u32 %s254, 4
        %s259 = sld [smem:[#allocation3 + %s258]]
        %v260 = vstv %s259
        %v261 = vmul.f32 %v256, %v260
        %v262 = vmul.f32 %v257, %v260
        %v263 = vld [vmem:[%s255 + $0x8] sm:$0xff]
        %v264 = vld [vmem:[%s255 + $0x28] sm:$0x1f]
        %s265 = sadd.s32 %s258, 1
        %s266 = sld [smem:[#allocation3 + %s265]]
        %v267 = vstv %s266
        %v268 = vmul.f32 %v263, %v267
        %v269 = vmul.f32 %v264, %v267
        %v270 = vadd.f32 %v261, %v268
        %v271 = vadd.f32 %v262, %v269
        %v272 = vld [vmem:[%s255 + $0x10] sm:$0xff]
        %v273 = vld [vmem:[%s255 + $0x30] sm:$0x1f]
        %s274 = sadd.s32 %s258, 2
        %s275 = sld [smem:[#allocation3 + %s274]]
        %v276 = vstv %s275
        %v277 = vmul.f32 %v272, %v276
        %v278 = vmul.f32 %v273, %v276
        %v279 = vadd.f32 %v270, %v277
        %v280 = vadd.f32 %v271, %v278
        %v281 = vld [vmem:[%s255 + $0x18] sm:$0xff]
        %v282 = vld [vmem:[%s255 + $0x38] sm:$0x1f]
        %s283 = sadd.s32 %s258, 3
        %s284 = sld [smem:[#allocation3 + %s283]]
        %v285 = vstv %s284
        %v286 = vmul.f32 %v281, %v285
        %v287 = vmul.f32 %v282, %v285
        %v288 = vadd.f32 %v279, %v286
        %v289 = vadd.f32 %v280, %v287
        %290 = vst [vmem:[#allocation2 + $0xd] sm:$0xff] %v288
        %291 = vst [vmem:[#allocation2 + $0x15] sm:$0x1f] %v289
        %v292 = vld [vmem:[#allocation2] sm:$0xff]
        %v293 = vld [vmem:[#allocation2 + $0x8] sm:$0xff]
        %v294 = vld [vmem:[#allocation2 + $0x10] sm:$0xff]
        %v295 = vld [vmem:[#allocation2 + $0x18] sm:$0x3]
        %v296 = vld [vmem:[%s2] sm:$0xff]
        %v297 = vld [vmem:[%s2 + $0x8] sm:$0xff]
        %v298 = vld [vmem:[%s2 + $0x10] sm:$0xff]
        %v299 = vld [vmem:[%s2 + $0x18] sm:$0xff]
        %v300 = vld [vmem:[%s2 + $0x20] sm:$0xff]
        %v301 = vld [vmem:[%s2 + $0x28] sm:$0xff]
        %v302 = vld [vmem:[%s2 + $0x30] sm:$0xff]
        %v303 = vld [vmem:[%s2 + $0x38] sm:$0xff]
        %v304 = vld [vmem:[%s2 + $0x40] sm:$0xff]
        %v305 = vld [vmem:[%s2 + $0x48] sm:$0xff]
        %v306 = vld [vmem:[%s2 + $0x50] sm:$0xff]
        %v307 = vld [vmem:[%s2 + $0x58] sm:$0xff]
        %v308 = vld [vmem:[%s2 + $0x60] sm:$0xff]
        %v309 = vld [vmem:[%s2 + $0x68] sm:$0xff]
        %v310 = vld [vmem:[%s2 + $0x70] sm:$0xff]
        %v311 = vld [vmem:[%s2 + $0x78] sm:$0xff]
        %v312 = vld [vmem:[%s2 + $0x80] sm:$0xff]
        %v313 = vld [vmem:[%s2 + $0x88] sm:$0xff]
        %v314 = vld [vmem:[%s2 + $0x90] sm:$0xff]
        %v315 = vld [vmem:[%s2 + $0x98] sm:$0xff]
        %v316 = vld [vmem:[%s2 + $0xa0] sm:$0xff]
        %v317 = vld [vmem:[%s2 + $0xa8] sm:$0xff]
        %v318 = vld [vmem:[%s2 + $0xb0] sm:$0xff]
        %v319 = vld [vmem:[%s2 + $0xb8] sm:$0xff]
        %v320 = vld [vmem:[%s2 + $0xc0] sm:$0xff]
        %v321 = vld [vmem:[%s2 + $0xc8] sm:$0xff]
        %v322 = vld [vmem:[%s2 + $0xd0] sm:$0xff]
        %v323 = vld [vmem:[%s2 + $0xd8] sm:$0xff]
        %v324 = vld [vmem:[%s2 + $0xe0] sm:$0xff]
        %v325 = vld [vmem:[%s2 + $0xe8] sm:$0xff]
        %v326 = vld [vmem:[%s2 + $0xf0] sm:$0xff]
        %v327 = vld [vmem:[%s2 + $0xf8] sm:$0xff]
        %v328 = vld [vmem:[%s3] sm:$0x3]
        %v330 = vlaneseq
        %v331 = vshrl.u32 %v330, 7
        %v332 = vsub.s32 0, %v331
        %v333 = vrot.slane %v328, %v332
        %v334 = vlaneseq
        %v335 = vshrl.u32 %v334, 7
        %v336 = vsub.s32 1, %v335
        %v337 = vrot.slane %v328, %v336
        %340 = vmatprep.subr.mxu0 %v297
        %341 = vmatpush1.msra.mxu0 %v296
        %342 = vmatprep.subr.mxu0 %v299
        %343 = vmatpush1.msra.mxu0 %v298
        %344 = vmatprep.subr.mxu0 %v301
        %345 = vmatpush1.msra.mxu0 %v300
        %346 = vmatprep.subr.mxu0 %v303
        %347 = vmatpush1.msra.mxu0 %v302
        %348 = vmatprep.subr.mxu0 %v305
        %349 = vmatpush1.msra.mxu0 %v304
        %350 = vmatprep.subr.mxu0 %v307
        %351 = vmatpush1.msra.mxu0 %v306
        %352 = vmatprep.subr.mxu0 %v309
        %353 = vmatpush1.msra.mxu0 %v308
        %354 = vmatprep.subr.mxu0 %v311
        %355 = vmatpush1.msra.mxu0 %v310
        %356 = vmatprep.subr.mxu0 %v313
        %357 = vmatpush1.msra.mxu0 %v312
        %358 = vmatprep.subr.mxu0 %v315
        %359 = vmatpush1.msra.mxu0 %v314
        %360 = vmatprep.subr.mxu0 %v317
        %361 = vmatpush1.msra.mxu0 %v316
        %362 = vmatprep.subr.mxu0 %v319
        %363 = vmatpush1.msra.mxu0 %v318
        %364 = vmatprep.subr.mxu0 %v321
        %365 = vmatpush1.msra.mxu0 %v320
        %366 = vmatprep.subr.mxu0 %v323
        %367 = vmatpush1.msra.mxu0 %v322
        %368 = vmatprep.subr.mxu0 %v325
        %369 = vmatpush1.msra.mxu0 %v324
        %370 = vmatprep.subr.mxu0 %v327
        %371 = vmatpush1.msra.mxu0 %v326
        %372 = vmatprep.subr.mxu0 0.0
        %373 = vmatpush1.msra.mxu0 0.0
        %374 = vmatprep.subr.mxu0 0.0
        %375 = vmatpush1.msra.mxu0 0.0
        %376 = vmatprep.subr.mxu0 0.0
        %377 = vmatpush1.msra.mxu0 0.0
        %378 = vmatprep.subr.mxu0 0.0
        %379 = vmatpush1.msra.mxu0 0.0
        %380 = vmatprep.subr.mxu0 0.0
        %381 = vmatpush1.msra.mxu0 0.0
        %382 = vmatprep.subr.mxu0 0.0
        %383 = vmatpush1.msra.mxu0 0.0
        %384 = vmatprep.subr.mxu0 0.0
        %385 = vmatpush1.msra.mxu0 0.0
        %386 = vmatprep.subr.mxu0 0.0
        %387 = vmatpush1.msra.mxu0 0.0
        %388 = vmatprep.subr.mxu0 0.0
        %389 = vmatpush1.msra.mxu0 0.0
        %390 = vmatprep.subr.mxu0 0.0
        %391 = vmatpush1.msra.mxu0 0.0
        %392 = vmatprep.subr.mxu0 0.0
        %393 = vmatpush1.msra.mxu0 0.0
        %394 = vmatprep.subr.mxu0 0.0
        %395 = vmatpush1.msra.mxu0 0.0
        %396 = vmatprep.subr.mxu0 0.0
        %397 = vmatpush1.msra.mxu0 0.0
        %398 = vmatprep.subr.mxu0 0.0
        %399 = vmatpush1.msra.mxu0 0.0
        %400 = vmatprep.subr.mxu0 0.0
        %401 = vmatpush1.msra.mxu0 0.0
        %402 = vmatprep.subr.mxu0 0.0
        %403 = vmatpush1.msra.mxu0 0.0
        %404 = vmatprep.mubr.f32.mxu0 0.0
        %405 = vmatmul.mubr.f32.gmra.mrb[0].mxu0 %v292
        %v406 = vpop.f32.mrb[0].mxu0
        %v407 = vadd.f32 %v333, %v406
        %v408 = vpop.f32.mrb[0].mxu0
        %v409 = vadd.f32 %v337, %v408
        %410 = vmatprep.mubr.f32.mxu0 0.0
        %411 = vmatmul.mubr.f32.gmra.mrb[0].mxu0 %v293
        %v412 = vpop.f32.mrb[0].mxu0
        %v413 = vadd.f32 %v333, %v412
        %v414 = vpop.f32.mrb[0].mxu0
        %v415 = vadd.f32 %v337, %v414
        %416 = vmatprep.mubr.f32.mxu0 0.0
        %417 = vmatmul.mubr.f32.gmra.mrb[0].mxu0 %v294
        %v418 = vpop.f32.mrb[0].mxu0
        %v419 = vadd.f32 %v333, %v418
        %v420 = vpop.f32.mrb[0].mxu0
        %v421 = vadd.f32 %v337, %v420
        %422 = vmatprep.mubr.f32.mxu0 0.0
        %423 = vmatmul.mubr.f32.gmra.mrb[0].mxu0 %v295
        %v424 = vpop.f32.mrb[0].mxu0
        %v425 = vadd.f32 %v333, %v424
        %v426 = vpop.f32.mrb[0].mxu0
        %v427 = vadd.f32 %v337, %v426
        %428 = vdwg.mxu0
        %429 = vst [vmem:[%s216] sm:$0xff] %v407
        %430 = vst [vmem:[%s216 + $0x8] sm:$0xff] %v409
        %431 = vst [vmem:[%s216 + $0x10] sm:$0xff] %v413
        %432 = vst [vmem:[%s216 + $0x18] sm:$0xff] %v415
        %433 = vst [vmem:[%s216 + $0x20] sm:$0xff] %v419
        %434 = vst [vmem:[%s216 + $0x28] sm:$0xff] %v421
        %435 = vst [vmem:[%s216 + $0x30] sm:$0x3] %v425
        %436 = vst [vmem:[%s216 + $0x38] sm:$0x3] %v427
        %p437 = scmp.lt.s32.totalorder %s16, 1
        %s438 = scalar_select %p437, %s16, 1
        %s439 = smul.addr %s438, 8
        %s440 = smul.addr %s439, 8
        %s441 = scalar_lea.vmem %s4, %s440
        // Predicated region
        $region41: #{tpu_custom_call.1} parent=35 // pred_check
          %p442 = pneg %p123
        $region42: #{tpu_custom_call.1} parent=35 // pred_check_branch
          %444 = sbr.rel (%p442) target = $region44
        $region43: #{tpu_custom_call.1} parent=35 // pred_region
          _
        $region44: #{tpu_custom_call.1} parent=35 // pred_fallthru
          _
      $region36: #{tpu_custom_call.1} parent=5 // pred_fallthru
        _
      %p445 = scmp.le.s32.totalorder 2, %s11
      // Predicated region
      $region45: #{tpu_custom_call.1} parent=5 // pred_check
        %p446 = pneg %p445
      $region46: #{tpu_custom_call.1} parent=5 // pred_check_branch
        %448 = sbr.rel (%p446) target = $region48
      $region47: #{tpu_custom_call.1} parent=5 // pred_region
        %s449 = ssub.s32 %s11, 2
        // Predicated region
        $region49: #{tpu_custom_call.1} parent=47 // pred_check
          %p450 = pneg %p129
        $region50: #{tpu_custom_call.1} parent=47 // pred_check_branch
          %452 = sbr.rel (%p450) target = $region52
        $region51: #{tpu_custom_call.1} parent=47 // pred_region
          %p453 = scmp.lt.s32.totalorder %s17, 1
          %s454 = scalar_select %p453, %s17, 1
          %s455 = smul.addr %s454, 8
          %s456 = smul.addr %s455, 8
          %s457 = scalar_lea.vmem %s4, %s456
        $region52: #{tpu_custom_call.1} parent=47 // pred_fallthru
          _
      $region48: #{tpu_custom_call.1} parent=5 // pred_fallthru
        _
    $region6: #{tpu_custom_call.1} parent=1 // loop_footer
      %s15 = sadd.s32 1, %s11
    $region7: #{tpu_custom_call.1} parent=1 // loop_footer_branch
      %10 = sbr.rel target = $region3
    $region8: #{tpu_custom_call.1} parent=1 // loop_exit
      _
    %458 = vsyncpa [#allocation4], 1
    %s459 = scalar_lea.sflag [#allocation4], 1
    %460 = vsyncpa %s459, 1

</llo_original>
